<compile_context>
chip_gen: v5e
topology: v5e:2x2
jax: 0.10.0
libtpu: 0.0.40
codegen_flags: <defaults>
</compile_context>

<pallas_src>
from functools import partial

import jax
import jax.numpy as jnp
from jax.experimental import pallas as pl
from jax.experimental.pallas import tpu as pltpu


def ffn_kernel(x_ref, w1_ref, b1_ref, w2_ref, b2_ref, lnw_ref, lnb_ref,
               out_ref, *, eps, matmul_dtype):
    x = x_ref[...]                                   # (tm, d_in) f32

    # Pre-LayerNorm (normalize_before=True); statistics in f32.
    mean = jnp.mean(x, axis=-1, keepdims=True)
    var = jnp.mean((x - mean) ** 2, axis=-1, keepdims=True)
    xn = (x - mean) * jax.lax.rsqrt(var + eps)
    xn = xn * lnw_ref[0] + lnb_ref[0]

    # First linear (MXU, low-precision operands, f32 accumulation) + exact GELU.
    h = jnp.dot(xn.astype(matmul_dtype), w1_ref[...],
                preferred_element_type=jnp.float32) + b1_ref[0]
    h = 0.5 * h * (1.0 + jax.lax.erf(h * 0.7071067811865476))

    # Second linear + residual (re-read the resident input tile — no live copy
    # of the residual held across both matmuls).
    y = jnp.dot(h.astype(matmul_dtype), w2_ref[...],
                preferred_element_type=jnp.float32) + b2_ref[0]
    out_ref[...] = y + x_ref[...]


def positionwise_feed_forward(x, params, *, eps=1e-6, block_rows=512,
                              matmul_dtype=jnp.bfloat16):
    """x: (B, L, d_in) float32.  Weights stored as (in, out): y = x @ W + b."""
    B, L, d_in = x.shape
    d_hid = params["w1"].shape[1]

    rows = B * L
    x2 = x.reshape(rows, d_in)

    # Row tile: sublane-aligned (multiple of 8), capped at block_rows, and
    # sized so the row grid has at least 2 steps whenever possible so the
    # "parallel" axis actually splits across TensorCores (v7x megacore).
    if rows >= 16:
        tm = min(block_rows, ((pl.cdiv(rows, 2) + 7) // 8) * 8)
    else:
        tm = ((rows + 7) // 8) * 8
    n_row_blocks = pl.cdiv(rows, tm)
    padded_rows = n_row_blocks * tm
    if padded_rows != rows:
        # One-time fallback; typical production shapes (rows % tm == 0) skip it.
        x2 = jnp.pad(x2, ((0, padded_rows - rows), (0, 0)))

    # Pre-cast weights to the MXU dtype ONCE, outside the kernel.
    w1 = params["w1"].astype(matmul_dtype)
    w2 = params["w2"].astype(matmul_dtype)

    kernel = partial(ffn_kernel, eps=eps, matmul_dtype=matmul_dtype)

    grid = (n_row_blocks,)
    resident = dict(pipeline_mode=pl.Buffered(1))     # constants: single-buffer
    in_specs = [
        pl.BlockSpec((tm, d_in), lambda i: (i, 0)),                     # x tile
        pl.BlockSpec((d_in, d_hid), lambda i: (0, 0), **resident),      # W1
        pl.BlockSpec((1, d_hid), lambda i: (0, 0), **resident),         # b1
        pl.BlockSpec((d_hid, d_in), lambda i: (0, 0), **resident),      # W2
        pl.BlockSpec((1, d_in), lambda i: (0, 0), **resident),          # b2
        pl.BlockSpec((1, d_in), lambda i: (0, 0), **resident),          # LN w
        pl.BlockSpec((1, d_in), lambda i: (0, 0), **resident),          # LN b
    ]
    out_specs = pl.BlockSpec((tm, d_in), lambda i: (i, 0))

    # VMEM budget (bytes): single-buffered weights + double-buffered row tiles
    # + f32 hidden intermediate; 2x headroom, capped for v7x's 64 MiB.
    w_itemsize = jnp.dtype(matmul_dtype).itemsize
    vmem_needed = (
        (d_in * d_hid + d_hid * d_in) * w_itemsize          # W1 + W2 (1 buf)
        + (2 * d_hid + 4 * d_in) * 4                        # biases / LN params
        + 2 * tm * d_in * 4                                 # x tile (2 bufs)
        + 2 * tm * d_in * 4                                 # out tile (2 bufs)
        + tm * d_hid * 4                                    # hidden intermediate
    )
    vmem_limit = int(min(64 * 1024 * 1024,
                         max(32 * 1024 * 1024, 2 * vmem_needed)))

    cost = pl.CostEstimate(
        flops=4 * padded_rows * d_in * d_hid,               # two matmuls
        transcendentals=padded_rows * d_hid,                # erf
        bytes_accessed=(2 * padded_rows * d_in * 4
                        + 2 * d_in * d_hid * w_itemsize),
    )

    out_flat = pl.pallas_call(
        kernel,
        out_shape=jax.ShapeDtypeStruct((padded_rows, d_in), jnp.float32),
        grid=grid,
        in_specs=in_specs,
        out_specs=out_specs,
        compiler_params=pltpu.CompilerParams(
            dimension_semantics=("parallel",),
            vmem_limit_bytes=vmem_limit),
        cost_estimate=cost,
    )(x2, w1, params["b1"], w2, params["b2"], params["lnw"], params["lnb"])

    if padded_rows != rows:
        out_flat = out_flat[:rows]
    return out_flat.reshape(B, L, d_in)


def reference_ffn(x, params, *, eps=1e-6):
    """Plain-JAX reference mirroring the PyTorch forward (eval mode)."""
    residual = x
    mean = jnp.mean(x, axis=-1, keepdims=True)
    var = jnp.mean((x - mean) ** 2, axis=-1, keepdims=True)
    xn = (x - mean) / jnp.sqrt(var + eps) * params["lnw"][0] + params["lnb"][0]
    h = xn @ params["w1"] + params["b1"][0]
    h = 0.5 * h * (1.0 + jax.lax.erf(h / jnp.sqrt(2.0)))
    y = h @ params["w2"] + params["b2"][0]
    return y + residual


def kaiming_uniform_linear(key, fan_in, shape):
    # Matches torch.nn.Linear default weight/bias init range.
    limit = 1.0 / (fan_in ** 0.5)
    return jax.random.uniform(key, shape, jnp.float32, -limit, limit)


if __name__ == "__main__":
    # Small, lane-aligned shapes consistent with the module:
    # (batch, seq, d_in) with hidden d_hid. rows = 32 -> tm = 16, grid = (2,).
    B, L, d_in, d_hid = 2, 16, 128, 256

    key = jax.random.PRNGKey(0)
    kx, k1, k2, k3, k4 = jax.random.split(key, 5)

    x = jax.random.normal(kx, (B, L, d_in), jnp.float32)

    params = {
        # stored as (in, out) so the kernel computes x @ W
        "w1": kaiming_uniform_linear(k1, d_in, (d_in, d_hid)),
        "b1": kaiming_uniform_linear(k2, d_in, (1, d_hid)),
        "w2": kaiming_uniform_linear(k3, d_hid, (d_hid, d_in)),
        "b2": kaiming_uniform_linear(k4, d_hid, (1, d_in)),
        "lnw": jnp.ones((1, d_in), jnp.float32),
        "lnb": jnp.zeros((1, d_in), jnp.float32),
    }

    ref = reference_ffn(x, params)

    # Fast (default) bf16-MXU path: loose tolerance vs. the f32 reference.
    out_bf16 = positionwise_feed_forward(x, params)   # matmul_dtype=bf16
    jax.block_until_ready(out_bf16)
    assert out_bf16.shape == (B, L, d_in)
    assert jnp.allclose(out_bf16, ref, atol=3e-2, rtol=3e-2), \
        float(jnp.max(jnp.abs(out_bf16 - ref)))

    # f32 path: exact-math check against the reference (tight tolerance).
    out_f32 = positionwise_feed_forward(x, params, matmul_dtype=jnp.float32)
    jax.block_until_ready(out_f32)
    assert jnp.allclose(out_f32, ref, atol=1e-5, rtol=1e-5), \
        float(jnp.max(jnp.abs(out_f32 - ref)))

    print("KERNEL_OK")
</pallas_src>

<mosaic_0001>
module attributes {stable_mosaic.version = 11 : i64} {
  func.func @ffn_kernel(%arg0: i32, %arg1: memref<16x128xf32, #tpu.memory_space<vmem>>, %arg2: memref<128x256xbf16, #tpu.memory_space<vmem>>, %arg3: memref<1x256xf32, #tpu.memory_space<vmem>>, %arg4: memref<256x128xbf16, #tpu.memory_space<vmem>>, %arg5: memref<1x128xf32, #tpu.memory_space<vmem>>, %arg6: memref<1x128xf32, #tpu.memory_space<vmem>>, %arg7: memref<1x128xf32, #tpu.memory_space<vmem>>, %arg8: memref<16x128xf32, #tpu.memory_space<vmem>>) attributes {dimension_semantics = [#tpu.dimension_semantics<parallel>], iteration_bounds = array<i64: 2>, scalar_prefetch = 0 : i64, scratch_operands = 0 : i64, tpu.core_type = #tpu.core_type<tc>, window_params = [{transform_indices = @transform_0, window_bounds = array<i64: 16, 128>}, {pipeline_mode = #tpu.pipeline_mode<synchronous>, transform_indices = @transform_1, window_bounds = array<i64: 128, 256>}, {pipeline_mode = #tpu.pipeline_mode<synchronous>, transform_indices = @transform_2, window_bounds = array<i64: 1, 256>}, {pipeline_mode = #tpu.pipeline_mode<synchronous>, transform_indices = @transform_3, window_bounds = array<i64: 256, 128>}, {pipeline_mode = #tpu.pipeline_mode<synchronous>, transform_indices = @transform_4, window_bounds = array<i64: 1, 128>}, {pipeline_mode = #tpu.pipeline_mode<synchronous>, transform_indices = @transform_5, window_bounds = array<i64: 1, 128>}, {pipeline_mode = #tpu.pipeline_mode<synchronous>, transform_indices = @transform_6, window_bounds = array<i64: 1, 128>}, {transform_indices = @transform_7, window_bounds = array<i64: 16, 128>}]} {
    %c0 = arith.constant 0 : index
    %c0_0 = arith.constant 0 : index
    %0 = vector.load %arg1[%c0, %c0_0] : memref<16x128xf32, #tpu.memory_space<vmem>>, vector<16x128xf32>
    %cst = arith.constant dense<0.000000e+00> : vector<16xf32>
    %1 = vector.multi_reduction <add>, %0, %cst [1] : vector<16x128xf32> to vector<16xf32>
    %2 = vector.shape_cast %1 : vector<16xf32> to vector<16x1xf32>
    %cst_1 = arith.constant 1.280000e+02 : f32
    %3 = vector.broadcast %cst_1 : f32 to vector<16x1xf32>
    %4 = arith.divf %2, %3 : vector<16x1xf32>
    %5 = vector.broadcast %4 : vector<16x1xf32> to vector<16x128xf32>
    %6 = arith.subf %0, %5 : vector<16x128xf32>
    %7 = arith.mulf %6, %6 : vector<16x128xf32>
    %cst_2 = arith.constant dense<0.000000e+00> : vector<16xf32>
    %8 = vector.multi_reduction <add>, %7, %cst_2 [1] : vector<16x128xf32> to vector<16xf32>
    %9 = vector.shape_cast %8 : vector<16xf32> to vector<16x1xf32>
    %cst_3 = arith.constant 1.280000e+02 : f32
    %10 = vector.broadcast %cst_3 : f32 to vector<16x1xf32>
    %11 = arith.divf %9, %10 : vector<16x1xf32>
    %12 = vector.broadcast %4 : vector<16x1xf32> to vector<16x128xf32>
    %13 = arith.subf %0, %12 : vector<16x128xf32>
    %cst_4 = arith.constant 9.99999997E-7 : f32
    %14 = vector.broadcast %cst_4 : f32 to vector<16x1xf32>
    %15 = arith.addf %11, %14 : vector<16x1xf32>
    %16 = math.rsqrt %15 : vector<16x1xf32>
    %17 = vector.broadcast %16 : vector<16x1xf32> to vector<16x128xf32>
    %18 = arith.mulf %13, %17 : vector<16x128xf32>
    %c0_5 = arith.constant 0 : index
    %c0_6 = arith.constant 0 : index
    %19 = vector.load %arg6[%c0_5, %c0_6] : memref<1x128xf32, #tpu.memory_space<vmem>>, vector<1x128xf32>
    %20 = vector.shape_cast %19 : vector<1x128xf32> to vector<128xf32>
    %21 = vector.shape_cast %20 : vector<128xf32> to vector<1x128xf32>
    %22 = vector.broadcast %21 : vector<1x128xf32> to vector<16x128xf32>
    %23 = arith.mulf %18, %22 : vector<16x128xf32>
    %c0_7 = arith.constant 0 : index
    %c0_8 = arith.constant 0 : index
    %24 = vector.load %arg7[%c0_7, %c0_8] : memref<1x128xf32, #tpu.memory_space<vmem>>, vector<1x128xf32>
    %25 = vector.shape_cast %24 : vector<1x128xf32> to vector<128xf32>
    %26 = vector.shape_cast %25 : vector<128xf32> to vector<1x128xf32>
    %27 = vector.broadcast %26 : vector<1x128xf32> to vector<16x128xf32>
    %28 = arith.addf %23, %27 : vector<16x128xf32>
    %29 = arith.truncf %28 : vector<16x128xf32> to vector<16x128xbf16>
    %c0_9 = arith.constant 0 : index
    %c0_10 = arith.constant 0 : index
    %30 = vector.load %arg2[%c0_9, %c0_10] : memref<128x256xbf16, #tpu.memory_space<vmem>>, vector<128x256xbf16>
    %cst_11 = arith.constant dense<0.000000e+00> : vector<16x256xf32>
    %31 = tpu.matmul %29, %30, %cst_11 {dimension_numbers = #tpu.dot_dimension_numbers<[1], [0], [0], [1], [0, 0, 1, 1], [], []>} : vector<16x128xbf16>, vector<128x256xbf16>, vector<16x256xf32> -> vector<16x256xf32>
    %c0_12 = arith.constant 0 : index
    %c0_13 = arith.constant 0 : index
    %32 = vector.load %arg3[%c0_12, %c0_13] : memref<1x256xf32, #tpu.memory_space<vmem>>, vector<1x256xf32>
    %33 = vector.shape_cast %32 : vector<1x256xf32> to vector<256xf32>
    %34 = vector.shape_cast %33 : vector<256xf32> to vector<1x256xf32>
    %35 = vector.broadcast %34 : vector<1x256xf32> to vector<16x256xf32>
    %36 = arith.addf %31, %35 : vector<16x256xf32>
    %cst_14 = arith.constant 5.000000e-01 : f32
    %37 = vector.broadcast %cst_14 : f32 to vector<16x256xf32>
    %38 = arith.mulf %37, %36 : vector<16x256xf32>
    %cst_15 = arith.constant 0.707106769 : f32
    %39 = vector.broadcast %cst_15 : f32 to vector<16x256xf32>
    %40 = arith.mulf %36, %39 : vector<16x256xf32>
    %41 = math.erf %40 : vector<16x256xf32>
    %cst_16 = arith.constant 1.000000e+00 : f32
    %42 = vector.broadcast %cst_16 : f32 to vector<16x256xf32>
    %43 = arith.addf %42, %41 : vector<16x256xf32>
    %44 = arith.mulf %38, %43 : vector<16x256xf32>
    %45 = arith.truncf %44 : vector<16x256xf32> to vector<16x256xbf16>
    %c0_17 = arith.constant 0 : index
    %c0_18 = arith.constant 0 : index
    %46 = vector.load %arg4[%c0_17, %c0_18] : memref<256x128xbf16, #tpu.memory_space<vmem>>, vector<256x128xbf16>
    %cst_19 = arith.constant dense<0.000000e+00> : vector<16x128xf32>
    %47 = tpu.matmul %45, %46, %cst_19 {dimension_numbers = #tpu.dot_dimension_numbers<[1], [0], [0], [1], [0, 0, 1, 1], [], []>} : vector<16x256xbf16>, vector<256x128xbf16>, vector<16x128xf32> -> vector<16x128xf32>
    %c0_20 = arith.constant 0 : index
    %c0_21 = arith.constant 0 : index
    %48 = vector.load %arg5[%c0_20, %c0_21] : memref<1x128xf32, #tpu.memory_space<vmem>>, vector<1x128xf32>
    %49 = vector.shape_cast %48 : vector<1x128xf32> to vector<128xf32>
    %50 = vector.shape_cast %49 : vector<128xf32> to vector<1x128xf32>
    %51 = vector.broadcast %50 : vector<1x128xf32> to vector<16x128xf32>
    %52 = arith.addf %47, %51 : vector<16x128xf32>
    %c0_22 = arith.constant 0 : index
    %c0_23 = arith.constant 0 : index
    %53 = vector.load %arg1[%c0_22, %c0_23] : memref<16x128xf32, #tpu.memory_space<vmem>>, vector<16x128xf32>
    %54 = arith.addf %52, %53 : vector<16x128xf32>
    %c0_24 = arith.constant 0 : index
    %c0_25 = arith.constant 0 : index
    %55 = vector.load %arg8[%c0_24, %c0_25] : memref<16x128xf32, #tpu.memory_space<vmem>>, vector<16x128xf32>
    tpu.vector_store %arg8[%c0_24, %c0_25], %54 {strides = array<i32>} : memref<16x128xf32, #tpu.memory_space<vmem>>, vector<16x128xf32>,
    return
  }
  func.func @transform_0(%arg0: i32) -> (i32, i32) {
    %c0_i32 = arith.constant 0 : i32
    %c0_i32_0 = arith.constant 0 : i32
    return %arg0, %c0_i32 : i32, i32
  }
  func.func @transform_1(%arg0: i32) -> (i32, i32) {
    %c0_i32 = arith.constant 0 : i32
    %c0_i32_0 = arith.constant 0 : i32
    %c0_i32_1 = arith.constant 0 : i32
    return %c0_i32, %c0_i32_0 : i32, i32
  }
  func.func @transform_2(%arg0: i32) -> (i32, i32) {
    %c0_i32 = arith.constant 0 : i32
    %c0_i32_0 = arith.constant 0 : i32
    %c0_i32_1 = arith.constant 0 : i32
    return %c0_i32, %c0_i32_0 : i32, i32
  }
  func.func @transform_3(%arg0: i32) -> (i32, i32) {
    %c0_i32 = arith.constant 0 : i32
    %c0_i32_0 = arith.constant 0 : i32
    %c0_i32_1 = arith.constant 0 : i32
    return %c0_i32, %c0_i32_0 : i32, i32
  }
  func.func @transform_4(%arg0: i32) -> (i32, i32) {
    %c0_i32 = arith.constant 0 : i32
    %c0_i32_0 = arith.constant 0 : i32
    %c0_i32_1 = arith.constant 0 : i32
    return %c0_i32, %c0_i32_0 : i32, i32
  }
  func.func @transform_5(%arg0: i32) -> (i32, i32) {
    %c0_i32 = arith.constant 0 : i32
    %c0_i32_0 = arith.constant 0 : i32
    %c0_i32_1 = arith.constant 0 : i32
    return %c0_i32, %c0_i32_0 : i32, i32
  }
  func.func @transform_6(%arg0: i32) -> (i32, i32) {
    %c0_i32 = arith.constant 0 : i32
    %c0_i32_0 = arith.constant 0 : i32
    %c0_i32_1 = arith.constant 0 : i32
    return %c0_i32, %c0_i32_0 : i32, i32
  }
  func.func @transform_7(%arg0: i32) -> (i32, i32) {
    %c0_i32 = arith.constant 0 : i32
    %c0_i32_0 = arith.constant 0 : i32
    return %arg0, %c0_i32 : i32, i32
  }
}

</mosaic_0001>

<llo_original>
// kernel: tpu_custom_call.1
$region0: #{tpu_custom_call.1}
  #allocation0 [shape = 'u32[]', space=smem, size = 0x4, offset = 0x4, fixed_abs, tag = 'smem constant byte address 0x4 - core index']
  #allocation1 [shape = 'u32[72,128]{1,0:T(1,128)}', space=vmem, size = 0x9000, scoped, tag = 'internal scratch']
  %s0 = inlined_call_operand.hbm [shape: f32[32,128], index: 0, kind: input, shape index: {}]
  %s1 = inlined_call_operand.hbm [shape: bf16[128,256], index: 1, kind: input, shape index: {}]
  %s2 = inlined_call_operand.hbm [shape: f32[1,256], index: 2, kind: input, shape index: {}]
  %s3 = inlined_call_operand.hbm [shape: bf16[256,128], index: 3, kind: input, shape index: {}]
  %s4 = inlined_call_operand.vmem [shape: f32[1,128], index: 4, kind: input, shape index: {}]
  %s5 = inlined_call_operand.vmem [shape: f32[1,128], index: 5, kind: input, shape index: {}]
  %s6 = inlined_call_operand.vmem [shape: f32[1,128], index: 6, kind: input, shape index: {}]
  %s7 = inlined_call_operand.hbm [shape: f32[32,128], index: 7, kind: output, shape index: {}]
  %s8 = sld [smem:[#allocation0]]
  $region77: #{tpu_custom_call.1} parent=0
    _
  %s10 = ssub.s32 1, %s8
  %s11 = scalar_select 0, %s10, %s8
  $region1: #{tpu_custom_call.1} parent=0
    #allocation2 [shape = 'u8[16384]{0}', space=vmem, size = 0x4000, scoped, tag = 'input window, operand 0']
    #allocation3 [shape = 's32[2]{0}', space=sflag, size = 0x8, scoped, tag = 'scoped memory for tpu_custom_call.1']
    #allocation4 [shape = 's32[2]{0}', space=sflag, size = 0x8, scoped, tag = 'scoped memory for tpu_custom_call.1']
    #allocation5 [shape = 'u8[65536]{0}', space=vmem, size = 0x10000, scoped, tag = 'input window, operand 1, single buffered']
    #allocation6 [shape = 's32[1]{0}', space=sflag, size = 0x4, scoped, tag = 'scoped memory for tpu_custom_call.1']
    #allocation7 [shape = 'u8[1024]{0}', space=vmem, size = 0x400, scoped, tag = 'input window, operand 2, single buffered']
    #allocation8 [shape = 'u8[65536]{0}', space=vmem, size = 0x10000, scoped, tag = 'input window, operand 3, single buffered']
    #allocation9 [shape = 's32[1]{0}', space=sflag, size = 0x4, scoped, tag = 'scoped memory for tpu_custom_call.1']
    #allocation10 [shape = 'u8[16384]{0}', space=vmem, size = 0x4000, scoped, tag = 'output window, operand 0']
    %12 = vsyncpa [#allocation3], 0
    %s13 = scalar_lea.sflag [#allocation3], 1
    %14 = vsyncpa %s13, 0
    %15 = vsyncpa [#allocation6], 0
    %16 = vsyncpa [#allocation9], 0
    %17 = vsyncpa [#allocation4], 0
    %s18 = scalar_lea.sflag [#allocation4], 1
    %19 = vsyncpa %s18, 0
    loop: start=0, step=1, limit=4
    $region2: #{tpu_custom_call.1} parent=1 // loop_pre_header
      _
    $region3: #{tpu_custom_call.1} parent=1 // loop_header
      %s21 = sphi 0, %s25
      %p22 = scmp.ge.s32.totalorder %s21, 4
      %s31 = sphi 0, %s33
      %s34 = sphi 0, %s31
      %s35 = sphi 0, %s34
      %s51 = sphi 0, %s35
      %s55 = sphi 0, %s55
      %s57 = sphi 0, %s55
      %s58 = sphi 0, %s57
      %s72 = sphi 0, %s58
      %s76 = sphi 0, %s76
      %s78 = sphi 0, %s76
      %s79 = sphi 0, %s78
      %s93 = sphi 0, %s79
      %s97 = sphi 0, %s97
      %s99 = sphi 0, %s97
      %s100 = sphi 0, %s99
      %s114 = sphi 0, %s100
      %s118 = sphi 0, %s118
      %s120 = sphi 0, %s118
      %s121 = sphi 0, %s120
      %s135 = sphi 0, %s121
      %s139 = sphi 0, %s139
      %s141 = sphi 0, %s139
      %s142 = sphi 0, %s141
      %s156 = sphi 0, %s142
      %s160 = sphi 0, %s160
      %s162 = sphi 0, %s160
      %s163 = sphi 0, %s162
      %s177 = sphi 0, %s163
      %s183 = sphi 0, %s185
      %s186 = sphi 0, %s183
      %s187 = sphi 0, %s186
      %s203 = sphi 0, %s187
    $region4: #{tpu_custom_call.1} parent=1 // loop_header_branch
      %24 = sbr.rel (%p22) target = $region8
    $region5: #{tpu_custom_call.1} parent=1 // loop_body
      %s26 = ssub.s32 %s21, 1
      %s27 = ssub.s32 %s21, 2
      %s28 = sadd.s32 %s21, 1
      %s29 = ssub.s32 %s21, %s28
      %p30 = scmp.eq.s32.totalorder %s29, 0
      %s32 = sadd.s32 %s31, 1
      %s33 = scalar_select %p30, %s31, %s32
      %p36 = pneg %p30
      %p37 = scmp.eq.s32.totalorder %s21, 1
      %p38 = por %p36, %p37
      %p39 = scmp.ne.s32.totalorder %s31, %s34
      %p40 = scmp.eq.s32.totalorder %s21, 0
      %p41 = por %p39, %p40
      %p42 = scmp.ne.s32.totalorder %s31, %s34
      %p43 = scmp.eq.s32.totalorder %s26, 1
      %p44 = por %p42, %p43
      %p45 = scmp.ne.s32.totalorder %s34, %s35
      %p46 = scmp.eq.s32.totalorder %s26, 0
      %p47 = por %p45, %p46
      %p48 = scmp.ne.s32.totalorder %s34, %s35
      %p49 = scmp.eq.s32.totalorder %s27, 1
      %p50 = por %p48, %p49
      %p52 = scmp.ne.s32.totalorder %s35, %s51
      %p53 = scmp.eq.s32.totalorder %s27, 0
      %p54 = por %p52, %p53
      %s56 = sadd.s32 %s55, 1
      %p59 = scmp.eq.s32.totalorder %s21, 1
      %p60 = scmp.ne.s32.totalorder %s55, %s57
      %p61 = scmp.eq.s32.totalorder %s21, 0
      %p62 = por %p60, %p61
      %p63 = scmp.ne.s32.totalorder %s55, %s57
      %p64 = scmp.eq.s32.totalorder %s26, 1
      %p65 = por %p63, %p64
      %p66 = scmp.ne.s32.totalorder %s57, %s58
      %p67 = scmp.eq.s32.totalorder %s26, 0
      %p68 = por %p66, %p67
      %p69 = scmp.ne.s32.totalorder %s57, %s58
      %p70 = scmp.eq.s32.totalorder %s27, 1
      %p71 = por %p69, %p70
      %p73 = scmp.ne.s32.totalorder %s58, %s72
      %p74 = scmp.eq.s32.totalorder %s27, 0
      %p75 = por %p73, %p74
      %s77 = sadd.s32 %s76, 1
      %p80 = scmp.eq.s32.totalorder %s21, 1
      %p81 = scmp.ne.s32.totalorder %s76, %s78
      %p82 = scmp.eq.s32.totalorder %s21, 0
      %p83 = por %p81, %p82
      %p84 = scmp.ne.s32.totalorder %s76, %s78
      %p85 = scmp.eq.s32.totalorder %s26, 1
      %p86 = por %p84, %p85
      %p87 = scmp.ne.s32.totalorder %s78, %s79
      %p88 = scmp.eq.s32.totalorder %s26, 0
      %p89 = por %p87, %p88
      %p90 = scmp.ne.s32.totalorder %s78, %s79
      %p91 = scmp.eq.s32.totalorder %s27, 1
      %p92 = por %p90, %p91
      %p94 = scmp.ne.s32.totalorder %s79, %s93
      %p95 = scmp.eq.s32.totalorder %s27, 0
      %p96 = por %p94, %p95
      %s98 = sadd.s32 %s97, 1
      %p101 = scmp.eq.s32.totalorder %s21, 1
      %p102 = scmp.ne.s32.totalorder %s97, %s99
      %p103 = scmp.eq.s32.totalorder %s21, 0
      %p104 = por %p102, %p103
      %p105 = scmp.ne.s32.totalorder %s97, %s99
      %p106 = scmp.eq.s32.totalorder %s26, 1
      %p107 = por %p105, %p106
      %p108 = scmp.ne.s32.totalorder %s99, %s100
      %p109 = scmp.eq.s32.totalorder %s26, 0
      %p110 = por %p108, %p109
      %p111 = scmp.ne.s32.totalorder %s99, %s100
      %p112 = scmp.eq.s32.totalorder %s27, 1
      %p113 = por %p111, %p112
      %p115 = scmp.ne.s32.totalorder %s100, %s114
      %p116 = scmp.eq.s32.totalorder %s27, 0
      %p117 = por %p115, %p116
      %s119 = sadd.s32 %s118, 1
      %p122 = scmp.eq.s32.totalorder %s21, 1
      %p123 = scmp.ne.s32.totalorder %s118, %s120
      %p124 = scmp.eq.s32.totalorder %s21, 0
      %p125 = por %p123, %p124
      %p126 = scmp.ne.s32.totalorder %s118, %s120
      %p127 = scmp.eq.s32.totalorder %s26, 1
      %p128 = por %p126, %p127
      %p129 = scmp.ne.s32.totalorder %s120, %s121
      %p130 = scmp.eq.s32.totalorder %s26, 0
      %p131 = por %p129, %p130
      %p132 = scmp.ne.s32.totalorder %s120, %s121
      %p133 = scmp.eq.s32.totalorder %s27, 1
      %p134 = por %p132, %p133
      %p136 = scmp.ne.s32.totalorder %s121, %s135
      %p137 = scmp.eq.s32.totalorder %s27, 0
      %p138 = por %p136, %p137
      %s140 = sadd.s32 %s139, 1
      %p143 = scmp.eq.s32.totalorder %s21, 1
      %p144 = scmp.ne.s32.totalorder %s139, %s141
      %p145 = scmp.eq.s32.totalorder %s21, 0
      %p146 = por %p144, %p145
      %p147 = scmp.ne.s32.totalorder %s139, %s141
      %p148 = scmp.eq.s32.totalorder %s26, 1
      %p149 = por %p147, %p148
      %p150 = scmp.ne.s32.totalorder %s141, %s142
      %p151 = scmp.eq.s32.totalorder %s26, 0
      %p152 = por %p150, %p151
      %p153 = scmp.ne.s32.totalorder %s141, %s142
      %p154 = scmp.eq.s32.totalorder %s27, 1
      %p155 = por %p153, %p154
      %p157 = scmp.ne.s32.totalorder %s142, %s156
      %p158 = scmp.eq.s32.totalorder %s27, 0
      %p159 = por %p157, %p158
      %s161 = sadd.s32 %s160, 1
      %p164 = scmp.eq.s32.totalorder %s21, 1
      %p165 = scmp.ne.s32.totalorder %s160, %s162
      %p166 = scmp.eq.s32.totalorder %s21, 0
      %p167 = por %p165, %p166
      %p168 = scmp.ne.s32.totalorder %s160, %s162
      %p169 = scmp.eq.s32.totalorder %s26, 1
      %p170 = por %p168, %p169
      %p171 = scmp.ne.s32.totalorder %s162, %s163
      %p172 = scmp.eq.s32.totalorder %s26, 0
      %p173 = por %p171, %p172
      %p174 = scmp.ne.s32.totalorder %s162, %s163
      %p175 = scmp.eq.s32.totalorder %s27, 1
      %p176 = por %p174, %p175
      %p178 = scmp.ne.s32.totalorder %s163, %s177
      %p179 = scmp.eq.s32.totalorder %s27, 0
      %p180 = por %p178, %p179
      %s181 = ssub.s32 %s21, %s28
      %p182 = scmp.eq.s32.totalorder %s181, 0
      %s184 = sadd.s32 %s183, 1
      %s185 = scalar_select %p182, %s183, %s184
      %p188 = pneg %p182
      %p189 = scmp.eq.s32.totalorder %s21, 1
      %p190 = por %p188, %p189
      %p191 = scmp.ne.s32.totalorder %s183, %s186
      %p192 = scmp.eq.s32.totalorder %s21, 0
      %p193 = por %p191, %p192
      %p194 = scmp.ne.s32.totalorder %s183, %s186
      %p195 = scmp.eq.s32.totalorder %s26, 1
      %p196 = por %p194, %p195
      %p197 = scmp.ne.s32.totalorder %s186, %s187
      %p198 = scmp.eq.s32.totalorder %s26, 0
      %p199 = por %p197, %p198
      %p200 = scmp.ne.s32.totalorder %s186, %s187
      %p201 = scmp.eq.s32.totalorder %s27, 1
      %p202 = por %p200, %p201
      %p204 = scmp.ne.s32.totalorder %s187, %s203
      %p205 = scmp.eq.s32.totalorder %s27, 0
      %p206 = por %p204, %p205
      %p207 = scmp.le.s32.totalorder 1, %s21
      %p208 = scmp.lt.s32.totalorder %s21, 3
      %p209 = pnand %p207, %p208
      %p210 = pneg %p209
      // Predicated region
      $region9: #{tpu_custom_call.1} parent=5 // pred_check
        _
      $region10: #{tpu_custom_call.1} parent=5 // pred_check_branch
        %212 = sbr.rel (%p209) target = $region12
      $region11: #{tpu_custom_call.1} parent=5 // pred_region
        %s213 = ssub.s32 %s21, 1
        // Predicated region
        $region13: #{tpu_custom_call.1} parent=11 // pred_check
          %p214 = pneg %p68
        $region14: #{tpu_custom_call.1} parent=11 // pred_check_branch
          %216 = sbr.rel (%p214) target = $region16
        $region15: #{tpu_custom_call.1} parent=11 // pred_region
          %218 = vsyncadd [#allocation6], 0
          %s219 = sshll.u32 %s1, 4
          %s220 = int_to_ptr.hbm [resolvable:$true] %s219
          %s221 = sshll.u32 [#allocation5], 4
          %s222 = int_to_ptr.vmem [resolvable:$true] %s221
          %227 = dma.hbm_to_vmem [thread:$0]  %s220, 2048, %s222, [#allocation6], 128, 128, 8
        $region16: #{tpu_custom_call.1} parent=11 // pred_fallthru
          _
        // Predicated region
        $region17: #{tpu_custom_call.1} parent=11 // pred_check
          %p228 = pneg %p89
        $region18: #{tpu_custom_call.1} parent=11 // pred_check_branch
          %230 = sbr.rel (%p228) target = $region20
        $region19: #{tpu_custom_call.1} parent=11 // pred_region
          %232 = vsyncadd [#allocation6], 0
          %s234 = sshll.u32 %s2, 4
          %s235 = int_to_ptr.hbm [resolvable:$true] %s234
          %s236 = sshll.u32 [#allocation7], 4
          %s237 = int_to_ptr.vmem [resolvable:$true] %s236
          %239 = dma.hbm_to_vmem [thread:$0]  %s235, 32, %s237, [#allocation6]
        $region20: #{tpu_custom_call.1} parent=11 // pred_fallthru
          _
        // Predicated region
        $region21: #{tpu_custom_call.1} parent=11 // pred_check
          %p240 = pneg %p110
        $region22: #{tpu_custom_call.1} parent=11 // pred_check_branch
          %242 = sbr.rel (%p240) target = $region24
        $region23: #{tpu_custom_call.1} parent=11 // pred_region
          %244 = vsyncadd [#allocation9], 0
          %s245 = sshll.u32 %s3, 4
          %s246 = int_to_ptr.hbm [resolvable:$true] %s245
          %s247 = sshll.u32 [#allocation8], 4
          %s248 = int_to_ptr.vmem [resolvable:$true] %s247
          %253 = dma.hbm_to_vmem [thread:$0]  %s246, 2048, %s248, [#allocation9], 64, 64, 4
        $region24: #{tpu_custom_call.1} parent=11 // pred_fallthru
          _
        // Predicated region
        $region25: #{tpu_custom_call.1} parent=11 // pred_check
          %p254 = pneg %p131
        $region26: #{tpu_custom_call.1} parent=11 // pred_check_branch
          %256 = sbr.rel (%p254) target = $region28
        $region27: #{tpu_custom_call.1} parent=11 // pred_region
          _
        $region28: #{tpu_custom_call.1} parent=11 // pred_fallthru
          _
        // Predicated region
        $region29: #{tpu_custom_call.1} parent=11 // pred_check
          %p257 = pneg %p152
        $region30: #{tpu_custom_call.1} parent=11 // pred_check_branch
          %259 = sbr.rel (%p257) target = $region32
        $region31: #{tpu_custom_call.1} parent=11 // pred_region
          _
        $region32: #{tpu_custom_call.1} parent=11 // pred_fallthru
          _
        // Predicated region
        $region33: #{tpu_custom_call.1} parent=11 // pred_check
          %p260 = pneg %p173
        $region34: #{tpu_custom_call.1} parent=11 // pred_check_branch
          %262 = sbr.rel (%p260) target = $region36
        $region35: #{tpu_custom_call.1} parent=11 // pred_region
          _
        $region36: #{tpu_custom_call.1} parent=11 // pred_fallthru
          _
      $region12: #{tpu_custom_call.1} parent=5 // pred_fallthru
        _
      %p263 = scmp.lt.s32.totalorder %s21, 2
      // Predicated region
      $region37: #{tpu_custom_call.1} parent=5 // pred_check
        %p264 = pneg %p263
      $region38: #{tpu_custom_call.1} parent=5 // pred_check_branch
        %266 = sbr.rel (%p264) target = $region40
      $region39: #{tpu_custom_call.1} parent=5 // pred_region
        // Predicated region
        $region41: #{tpu_custom_call.1} parent=39 // pred_check
          %p267 = pneg %p41
        $region42: #{tpu_custom_call.1} parent=39 // pred_check_branch
          %269 = sbr.rel (%p267) target = $region44
        $region43: #{tpu_custom_call.1} parent=39 // pred_region
          %s270 = sand.u32 %s31, 1
          %s271 = scalar_lea.sflag [#allocation3], %s270
          %s272 = sand.u32 %s31, 1
          %s273 = smul.addr %s272, 16
          %s274 = scalar_lea.vmem [#allocation2], %s273
          %s275 = smul.u32 2, %s21
          %277 = vsyncadd %s271, 0
          %s278 = smul.addr %s275, 8
          %s279 = scalar_lea.hbm %s0, %s278
          %s280 = sshll.u32 %s279, 4
          %s281 = int_to_ptr.hbm [resolvable:$true] %s280
          %s282 = sshll.u32 %s274, 4
          %s283 = int_to_ptr.vmem [resolvable:$true] %s282
          %288 = dma.hbm_to_vmem [thread:$0]  %s281, 256, %s283, %s271, 128, 128, 8
        $region44: #{tpu_custom_call.1} parent=39 // pred_fallthru
          _
      $region40: #{tpu_custom_call.1} parent=5 // pred_fallthru
        _
      %p289 = scmp.le.s32.totalorder 1, %s21
      %p290 = scmp.lt.s32.totalorder %s21, 3
      %p291 = pnand %p289, %p290
      %p292 = pneg %p291
      // Predicated region
      $region45: #{tpu_custom_call.1} parent=5 // pred_check
        _
      $region46: #{tpu_custom_call.1} parent=5 // pred_check_branch
        %294 = sbr.rel (%p291) target = $region48
      $region47: #{tpu_custom_call.1} parent=5 // pred_region
        %s295 = ssub.s32 %s21, 1
        %s296 = sand.u32 %s34, 1
        %s297 = scalar_lea.sflag [#allocation3], %s296
        %s298 = sand.u32 %s34, 1
        %s299 = smul.addr %s298, 16
        %s300 = scalar_lea.vmem [#allocation2], %s299
        // Predicated region
        $region49: #{tpu_custom_call.1} parent=47 // pred_check
          %p301 = pneg %p47
        $region50: #{tpu_custom_call.1} parent=47 // pred_check_branch
          %303 = sbr.rel (%p301) target = $region52
        $region51: #{tpu_custom_call.1} parent=47 // pred_region
          %305 = dma.done %s297, 256
        $region52: #{tpu_custom_call.1} parent=47 // pred_fallthru
          _
        // Predicated region
        $region53: #{tpu_custom_call.1} parent=47 // pred_check
          %p306 = pneg %p68
        $region54: #{tpu_custom_call.1} parent=47 // pred_check_branch
          %308 = sbr.rel (%p306) target = $region56
        $region55: #{tpu_custom_call.1} parent=47 // pred_region
          %310 = dma.done [#allocation6], 2048
        $region56: #{tpu_custom_call.1} parent=47 // pred_fallthru
          _
        // Predicated region
        $region57: #{tpu_custom_call.1} parent=47 // pred_check
          %p311 = pneg %p89
        $region58: #{tpu_custom_call.1} parent=47 // pred_check_branch
          %313 = sbr.rel (%p311) target = $region60
        $region59: #{tpu_custom_call.1} parent=47 // pred_region
          %315 = dma.done [#allocation6], 32
        $region60: #{tpu_custom_call.1} parent=47 // pred_fallthru
          _
        // Predicated region
        $region61: #{tpu_custom_call.1} parent=47 // pred_check
          %p316 = pneg %p110
        $region62: #{tpu_custom_call.1} parent=47 // pred_check_branch
          %318 = sbr.rel (%p316) target = $region64
        $region63: #{tpu_custom_call.1} parent=47 // pred_region
          %320 = dma.done [#allocation9], 2048
        $region64: #{tpu_custom_call.1} parent=47 // pred_fallthru
          _
        %s321 = sand.u32 %s34, 1
        %s322 = scalar_lea.sflag [#allocation3], %s321
        %s323 = sand.u32 %s34, 1
        %s324 = smul.addr %s323, 16
        %s325 = scalar_lea.vmem [#allocation2], %s324
        %p326 = pneg %p47
        %p327 = pneg %p44
        %p328 = pneg %p68
        %p329 = pneg %p65
        %p330 = pneg %p89
        %p331 = pneg %p86
        %p332 = pneg %p110
        %p333 = pneg %p107
        %p334 = pneg %p131
        %p335 = pneg %p128
        %p336 = pneg %p152
        %p337 = pneg %p149
        %p338 = pneg %p173
        %p339 = pneg %p170
        %p340 = pneg %p199
        %p341 = pneg %p196
        %s342 = sand.u32 %s186, 1
        %s343 = scalar_lea.sflag [#allocation4], %s342
        %s344 = sand.u32 %s186, 1
        %s345 = smul.addr %s344, 16
        %s346 = scalar_lea.vmem [#allocation10], %s345
        %s347 = smul.u32 2, %s26
        %s348 = smul.u32 2, %s26
        %v349 = vld [vmem:[%s300] sm:$0xff]
        %v350 = vld [vmem:[%s300 + $0x8] sm:$0xff]
        %351 = vadd.xlane.f32.xlu0 %v349
        %v352 = vpop.xlane.xlu0 %351
        %353 = vadd.xlane.f32.xlu0 %v350
        %v354 = vpop.xlane.xlu0 %353
        %v355 = vrcp.pop 128.0
        %v356 = vmul.f32 128.0, %v355
        %v357 = vsub.f32 1.0, %v356
        %v358 = vmul.f32 %v355, %v357
        %v359 = vadd.f32 %v355, %v358
        %vm360 = vweird.f32 %v355
        %v361 = vsel %vm360, %v355, %v359
        %v362 = vmul.f32 %v352, %v361
        %v363 = vmul.f32 %v354, %v361
        %v364 = vsub.f32 %v349, %v362
        %v365 = vsub.f32 %v350, %v363
        %v366 = vmul.f32 %v364, %v364
        %v367 = vmul.f32 %v365, %v365
        %368 = vadd.xlane.f32.xlu0 %v366
        %v369 = vpop.xlane.xlu0 %368
        %370 = vadd.xlane.f32.xlu0 %v367
        %v371 = vpop.xlane.xlu0 %370
        %v372 = vmul.f32 %v369, %v361
        %v373 = vmul.f32 %v371, %v361
        %v374 = vadd.f32 %v372, 1e-06
        %v375 = vadd.f32 %v373, 1e-06
        %v376 = vrsqrt.pop %v374
        %v377 = vmul.f32 %v376, %v374
        %v378 = vmul.f32 %v377, %v376
        %v379 = vmul.f32 0.5, %v378
        %v380 = vsub.f32 1.5, %v379
        %v381 = vmul.f32 %v376, %v380
        %vm382 = vweird.f32 %v374
        %vm383 = vweird.f32 %v376
        %vm384 = vmor %vm382, %vm383
        %v385 = vsel %vm384, %v376, %v381
        %v386 = vrsqrt.pop %v375
        %v387 = vmul.f32 %v386, %v375
        %v388 = vmul.f32 %v387, %v386
        %v389 = vmul.f32 0.5, %v388
        %v390 = vsub.f32 1.5, %v389
        %v391 = vmul.f32 %v386, %v390
        %vm392 = vweird.f32 %v375
        %vm393 = vweird.f32 %v386
        %vm394 = vmor %vm392, %vm393
        %v395 = vsel %vm394, %v386, %v391
        %v396 = vmul.f32 %v364, %v385
        %v397 = vmul.f32 %v365, %v395
        %v398 = vld [vmem:[%s5] sm:$0x1]
        %v400 = vperm.slane %v398, 0
        %v402 = vmul.f32 %v396, %v400
        %v403 = vmul.f32 %v397, %v400
        %v404 = vld [vmem:[%s6] sm:$0x1]
        %v406 = vperm.slane %v404, 0
        %v408 = vadd.f32 %v402, %v406
        %v409 = vadd.f32 %v403, %v406
        %v410 = vpack.c.bf16 %v409, %v408
        %v411 = vld [vmem:[#allocation5] sm:$0xff]
        %v412 = vld [vmem:[#allocation5 + $0x8] sm:$0xff]
        %v413 = vld [vmem:[#allocation5 + $0x10] sm:$0xff]
        %v414 = vld [vmem:[#allocation5 + $0x18] sm:$0xff]
        %v415 = vld [vmem:[#allocation5 + $0x20] sm:$0xff]
        %v416 = vld [vmem:[#allocation5 + $0x28] sm:$0xff]
        %v417 = vld [vmem:[#allocation5 + $0x30] sm:$0xff]
        %v418 = vld [vmem:[#allocation5 + $0x38] sm:$0xff]
        %v419 = vld [vmem:[#allocation5 + $0x40] sm:$0xff]
        %v420 = vld [vmem:[#allocation5 + $0x48] sm:$0xff]
        %v421 = vld [vmem:[#allocation5 + $0x50] sm:$0xff]
        %v422 = vld [vmem:[#allocation5 + $0x58] sm:$0xff]
        %v423 = vld [vmem:[#allocation5 + $0x60] sm:$0xff]
        %v424 = vld [vmem:[#allocation5 + $0x68] sm:$0xff]
        %v425 = vld [vmem:[#allocation5 + $0x70] sm:$0xff]
        %v426 = vld [vmem:[#allocation5 + $0x78] sm:$0xff]
        %v427 = vld [vmem:[#allocation7] sm:$0x3]
        %v429 = vperm.slane %v427, 0
        %v430 = vperm.slane %v427, 1
        %v449 = vunpack.c.l.b16 %v411
        %v450 = vunpack.c.h.b16 %v411
        %v451 = vunpack.c.l.b16 %v412
        %v452 = vunpack.c.h.b16 %v412
        %v453 = vunpack.c.l.b16 %v413
        %v454 = vunpack.c.h.b16 %v413
        %v455 = vunpack.c.l.b16 %v414
        %v456 = vunpack.c.h.b16 %v414
        %v457 = vunpack.c.l.b16 %v415
        %v458 = vunpack.c.h.b16 %v415
        %v459 = vunpack.c.l.b16 %v416
        %v460 = vunpack.c.h.b16 %v416
        %v461 = vunpack.c.l.b16 %v417
        %v462 = vunpack.c.h.b16 %v417
        %v463 = vunpack.c.l.b16 %v418
        %v464 = vunpack.c.h.b16 %v418
        %v465 = vunpack.c.l.b16 %v419
        %v466 = vunpack.c.h.b16 %v419
        %v467 = vunpack.c.l.b16 %v420
        %v468 = vunpack.c.h.b16 %v420
        %v469 = vunpack.c.l.b16 %v421
        %v470 = vunpack.c.h.b16 %v421
        %v471 = vunpack.c.l.b16 %v422
        %v472 = vunpack.c.h.b16 %v422
        %v473 = vunpack.c.l.b16 %v423
        %v474 = vunpack.c.h.b16 %v423
        %v475 = vunpack.c.l.b16 %v424
        %v476 = vunpack.c.h.b16 %v424
        %v477 = vunpack.c.l.b16 %v425
        %v478 = vunpack.c.h.b16 %v425
        %v479 = vunpack.c.l.b16 %v426
        %v480 = vunpack.c.h.b16 %v426
        %v481 = vpack.c.b16 %v451, %v449
        %v482 = vpack.c.b16 %v452, %v450
        %v483 = vpack.c.b16 %v455, %v453
        %v484 = vpack.c.b16 %v456, %v454
        %v485 = vpack.c.b16 %v459, %v457
        %v486 = vpack.c.b16 %v460, %v458
        %v487 = vpack.c.b16 %v463, %v461
        %v488 = vpack.c.b16 %v464, %v462
        %v489 = vpack.c.b16 %v467, %v465
        %v490 = vpack.c.b16 %v468, %v466
        %v491 = vpack.c.b16 %v471, %v469
        %v492 = vpack.c.b16 %v472, %v470
        %v493 = vpack.c.b16 %v475, %v473
        %v494 = vpack.c.b16 %v476, %v474
        %v495 = vpack.c.b16 %v479, %v477
        %v496 = vpack.c.b16 %v480, %v478
        %513 = vmatpush.bf16.msra.mxu0 %v495
        %514 = vmatpush.bf16.msra.mxu0 %v493
        %515 = vmatpush.bf16.msra.mxu0 %v491
        %516 = vmatpush.bf16.msra.mxu0 %v489
        %517 = vmatpush.bf16.msra.mxu0 %v487
        %518 = vmatpush.bf16.msra.mxu0 %v485
        %519 = vmatpush.bf16.msra.mxu0 %v483
        %520 = vmatpush.bf16.msra.mxu0 %v481
        %521 = vmatmul.bf16.gmra.mxu0 %v410
        %v522 = vpop.f32.mrf.mxu0
        %v523 = vadd.f32 %v429, %v522
        %v524 = vpop.f32.mrf.mxu0
        %v525 = vadd.f32 %v429, %v524
        %526 = vdwg.mxu0
        %527 = vmatpush.bf16.msra.mxu0 %v496
        %528 = vmatpush.bf16.msra.mxu0 %v494
        %529 = vmatpush.bf16.msra.mxu0 %v492
        %530 = vmatpush.bf16.msra.mxu0 %v490
        %531 = vmatpush.bf16.msra.mxu0 %v488
        %532 = vmatpush.bf16.msra.mxu0 %v486
        %533 = vmatpush.bf16.msra.mxu0 %v484
        %534 = vmatpush.bf16.msra.mxu0 %v482
        %535 = vmatmul.bf16.gmra.mxu0 %v410
        %v536 = vpop.f32.mrf.mxu0
        %v537 = vadd.f32 %v430, %v536
        %v538 = vpop.f32.mrf.mxu0
        %v539 = vadd.f32 %v430, %v538
        %540 = vdwg.mxu0
        %v541 = vmul.f32 %v523, 0.5
        %v542 = vmul.f32 %v537, 0.5
        %v543 = vmul.f32 %v525, 0.5
        %v544 = vmul.f32 %v539, 0.5
        %v545 = vmul.f32 %v523, 0.70710677
        %v546 = vmul.f32 %v537, 0.70710677
        %v547 = vmul.f32 %v525, 0.70710677
        %v548 = vmul.f32 %v539, 0.70710677
        %v549 = vmul.f32 %v545, %v545
        %v550 = vmin.f32 16.0, %v549
        %v551 = vmul.f32 %v550, 2.1237322e-06
        %v552 = vadd.f32 %v551, 0.00028619796
        %v553 = vmul.f32 %v550, %v552
        %v554 = vadd.f32 %v553, 0.0036580483
        %v555 = vmul.f32 %v550, %v554
        %v556 = vadd.f32 %v555, 0.05243302
        %v557 = vmul.f32 %v550, %v556
        %v558 = vadd.f32 %v557, 0.18741608
        %v559 = vmul.f32 %v550, %v558
        %v560 = vadd.f32 %v559, 1.1283791
        %v561 = vmul.f32 %v545, %v560
        %v562 = vmul.f32 %v550, 3.8918573e-05
        %v563 = vadd.f32 %v562, 0.001143296
        %v564 = vmul.f32 %v550, %v563
        %v565 = vadd.f32 %v564, 0.014752088
        %v566 = vmul.f32 %v550, %v565
        %v567 = vadd.f32 %v566, 0.112945676
        %v568 = vmul.f32 %v550, %v567
        %v569 = vadd.f32 %v568, 0.4994258
        %v570 = vmul.f32 %v550, %v569
        %v571 = vadd.f32 %v570, 1.0
        %v572 = vrcp.pop %v571
        %v573 = vmul.f32 %v571, %v572
        %v574 = vsub.f32 1.0, %v573
        %v575 = vmul.f32 %v572, %v574
        %v576 = vadd.f32 %v572, %v575
        %vm577 = vweird.f32 %v571
        %vm578 = vweird.f32 %v572
        %vm579 = vmor %vm577, %vm578
        %v580 = vsel %vm579, %v572, %v576
        %v581 = vand.u32 2147483647, %v571
        %vm582 = vcmp.eq.f32.partialorder %v581, 8.507059e+37
        %v583 = vand.u32 %v571, 2147483648
        %v584 = vor.u32 1.1754944e-38, %v583
        %v585 = vsel %vm582, %v584, %v580
        %v586 = vmul.f32 %v561, %v585
        %v587 = vmin.f32 %v586, 1.0
        %v588 = vmax.f32 %v587, -1.0
        %v589 = vmul.f32 %v546, %v546
        %v590 = vmin.f32 16.0, %v589
        %v591 = vmul.f32 %v590, 2.1237322e-06
        %v592 = vadd.f32 %v591, 0.00028619796
        %v593 = vmul.f32 %v590, %v592
        %v594 = vadd.f32 %v593, 0.0036580483
        %v595 = vmul.f32 %v590, %v594
        %v596 = vadd.f32 %v595, 0.05243302
        %v597 = vmul.f32 %v590, %v596
        %v598 = vadd.f32 %v597, 0.18741608
        %v599 = vmul.f32 %v590, %v598
        %v600 = vadd.f32 %v599, 1.1283791
        %v601 = vmul.f32 %v546, %v600
        %v602 = vmul.f32 %v590, 3.8918573e-05
        %v603 = vadd.f32 %v602, 0.001143296
        %v604 = vmul.f32 %v590, %v603
        %v605 = vadd.f32 %v604, 0.014752088
        %v606 = vmul.f32 %v590, %v605
        %v607 = vadd.f32 %v606, 0.112945676
        %v608 = vmul.f32 %v590, %v607
        %v609 = vadd.f32 %v608, 0.4994258
        %v610 = vmul.f32 %v590, %v609
        %v611 = vadd.f32 %v610, 1.0
        %v612 = vrcp.pop %v611
        %v613 = vmul.f32 %v611, %v612
        %v614 = vsub.f32 1.0, %v613
        %v615 = vmul.f32 %v612, %v614
        %v616 = vadd.f32 %v612, %v615
        %vm617 = vweird.f32 %v611
        %vm618 = vweird.f32 %v612
        %vm619 = vmor %vm617, %vm618
        %v620 = vsel %vm619, %v612, %v616
        %v621 = vand.u32 2147483647, %v611
        %vm622 = vcmp.eq.f32.partialorder %v621, 8.507059e+37
        %v623 = vand.u32 %v611, 2147483648
        %v624 = vor.u32 1.1754944e-38, %v623
        %v625 = vsel %vm622, %v624, %v620
        %v626 = vmul.f32 %v601, %v625
        %v627 = vmin.f32 %v626, 1.0
        %v628 = vmax.f32 %v627, -1.0
        %v629 = vmul.f32 %v547, %v547
        %v630 = vmin.f32 16.0, %v629
        %v631 = vmul.f32 %v630, 2.1237322e-06
        %v632 = vadd.f32 %v631, 0.00028619796
        %v633 = vmul.f32 %v630, %v632
        %v634 = vadd.f32 %v633, 0.0036580483
        %v635 = vmul.f32 %v630, %v634
        %v636 = vadd.f32 %v635, 0.05243302
        %v637 = vmul.f32 %v630, %v636
        %v638 = vadd.f32 %v637, 0.18741608
        %v639 = vmul.f32 %v630, %v638
        %v640 = vadd.f32 %v639, 1.1283791
        %v641 = vmul.f32 %v547, %v640
        %v642 = vmul.f32 %v630, 3.8918573e-05
        %v643 = vadd.f32 %v642, 0.001143296
        %v644 = vmul.f32 %v630, %v643
        %v645 = vadd.f32 %v644, 0.014752088
        %v646 = vmul.f32 %v630, %v645
        %v647 = vadd.f32 %v646, 0.112945676
        %v648 = vmul.f32 %v630, %v647
        %v649 = vadd.f32 %v648, 0.4994258
        %v650 = vmul.f32 %v630, %v649
        %v651 = vadd.f32 %v650, 1.0
        %v652 = vrcp.pop %v651
        %v653 = vmul.f32 %v651, %v652
        %v654 = vsub.f32 1.0, %v653
        %v655 = vmul.f32 %v652, %v654
        %v656 = vadd.f32 %v652, %v655
        %vm657 = vweird.f32 %v651
        %vm658 = vweird.f32 %v652
        %vm659 = vmor %vm657, %vm658
        %v660 = vsel %vm659, %v652, %v656
        %v661 = vand.u32 2147483647, %v651
        %vm662 = vcmp.eq.f32.partialorder %v661, 8.507059e+37
        %v663 = vand.u32 %v651, 2147483648
        %v664 = vor.u32 1.1754944e-38, %v663
        %v665 = vsel %vm662, %v664, %v660
        %v666 = vmul.f32 %v641, %v665
        %v667 = vmin.f32 %v666, 1.0
        %v668 = vmax.f32 %v667, -1.0
        %v669 = vmul.f32 %v548, %v548
        %v670 = vmin.f32 16.0, %v669
        %v671 = vmul.f32 %v670, 2.1237322e-06
        %v672 = vadd.f32 %v671, 0.00028619796
        %v673 = vmul.f32 %v670, %v672
        %v674 = vadd.f32 %v673, 0.0036580483
        %v675 = vmul.f32 %v670, %v674
        %v676 = vadd.f32 %v675, 0.05243302
        %v677 = vmul.f32 %v670, %v676
        %v678 = vadd.f32 %v677, 0.18741608
        %v679 = vmul.f32 %v670, %v678
        %v680 = vadd.f32 %v679, 1.1283791
        %v681 = vmul.f32 %v548, %v680
        %v682 = vmul.f32 %v670, 3.8918573e-05
        %v683 = vadd.f32 %v682, 0.001143296
        %v684 = vmul.f32 %v670, %v683
        %v685 = vadd.f32 %v684, 0.014752088
        %v686 = vmul.f32 %v670, %v685
        %v687 = vadd.f32 %v686, 0.112945676
        %v688 = vmul.f32 %v670, %v687
        %v689 = vadd.f32 %v688, 0.4994258
        %v690 = vmul.f32 %v670, %v689
        %v691 = vadd.f32 %v690, 1.0
        %v692 = vrcp.pop %v691
        %v693 = vmul.f32 %v691, %v692
        %v694 = vsub.f32 1.0, %v693
        %v695 = vmul.f32 %v692, %v694
        %v696 = vadd.f32 %v692, %v695
        %vm697 = vweird.f32 %v691
        %vm698 = vweird.f32 %v692
        %vm699 = vmor %vm697, %vm698
        %v700 = vsel %vm699, %v692, %v696
        %v701 = vand.u32 2147483647, %v691
        %vm702 = vcmp.eq.f32.partialorder %v701, 8.507059e+37
        %v703 = vand.u32 %v691, 2147483648
        %v704 = vor.u32 1.1754944e-38, %v703
        %v705 = vsel %vm702, %v704, %v700
        %v706 = vmul.f32 %v681, %v705
        %v707 = vmin.f32 %v706, 1.0
        %v708 = vmax.f32 %v707, -1.0
        %v709 = vadd.f32 %v588, 1.0
        %v710 = vadd.f32 %v628, 1.0
        %v711 = vadd.f32 %v668, 1.0
        %v712 = vadd.f32 %v708, 1.0
        %v713 = vmul.f32 %v541, %v709
        %v714 = vmul.f32 %v542, %v710
        %v715 = vmul.f32 %v543, %v711
        %v716 = vmul.f32 %v544, %v712
        %v717 = vpack.c.bf16 %v715, %v713
        %v718 = vpack.c.bf16 %v716, %v714
        %v719 = vld [vmem:[#allocation8] sm:$0xf]
        %v720 = vld [vmem:[#allocation8 + $0x4] sm:$0xf]
        %v721 = vld [vmem:[#allocation8 + $0x8] sm:$0xf]
        %v722 = vld [vmem:[#allocation8 + $0xc] sm:$0xf]
        %v723 = vld [vmem:[#allocation8 + $0x10] sm:$0xf]
        %v724 = vld [vmem:[#allocation8 + $0x14] sm:$0xf]
        %v725 = vld [vmem:[#allocation8 + $0x18] sm:$0xf]
        %v726 = vld [vmem:[#allocation8 + $0x1c] sm:$0xf]
        %v727 = vld [vmem:[#allocation8 + $0x20] sm:$0xf]
        %v728 = vld [vmem:[#allocation8 + $0x24] sm:$0xf]
        %v729 = vld [vmem:[#allocation8 + $0x28] sm:$0xf]
        %v730 = vld [vmem:[#allocation8 + $0x2c] sm:$0xf]
        %v731 = vld [vmem:[#allocation8 + $0x30] sm:$0xf]
        %v732 = vld [vmem:[#allocation8 + $0x34] sm:$0xf]
        %v733 = vld [vmem:[#allocation8 + $0x38] sm:$0xf]
        %v734 = vld [vmem:[#allocation8 + $0x3c] sm:$0xf]
        %v735 = vld [vmem:[#allocation8 + $0x40] sm:$0xf]
        %v736 = vld [vmem:[#allocation8 + $0x44] sm:$0xf]
        %v737 = vld [vmem:[#allocation8 + $0x48] sm:$0xf]
        %v738 = vld [vmem:[#allocation8 + $0x4c] sm:$0xf]
        %v739 = vld [vmem:[#allocation8 + $0x50] sm:$0xf]
        %v740 = vld [vmem:[#allocation8 + $0x54] sm:$0xf]
        %v741 = vld [vmem:[#allocation8 + $0x58] sm:$0xf]
        %v742 = vld [vmem:[#allocation8 + $0x5c] sm:$0xf]
        %v743 = vld [vmem:[#allocation8 + $0x60] sm:$0xf]
        %v744 = vld [vmem:[#allocation8 + $0x64] sm:$0xf]
        %v745 = vld [vmem:[#allocation8 + $0x68] sm:$0xf]
        %v746 = vld [vmem:[#allocation8 + $0x6c] sm:$0xf]
        %v747 = vld [vmem:[#allocation8 + $0x70] sm:$0xf]
        %v748 = vld [vmem:[#allocation8 + $0x74] sm:$0xf]
        %v749 = vld [vmem:[#allocation8 + $0x78] sm:$0xf]
        %v750 = vld [vmem:[#allocation8 + $0x7c] sm:$0xf]
        %v751 = vld [vmem:[%s4] sm:$0x1]
        %v753 = vperm.slane %v751, 0
        %v787 = vunpack.c.l.b16 %v719
        %v788 = vunpack.c.l.b16 %v720
        %v789 = vunpack.c.l.b16 %v721
        %v790 = vunpack.c.l.b16 %v722
        %v791 = vunpack.c.l.b16 %v723
        %v792 = vunpack.c.l.b16 %v724
        %v793 = vunpack.c.l.b16 %v725
        %v794 = vunpack.c.l.b16 %v726
        %v795 = vunpack.c.l.b16 %v727
        %v796 = vunpack.c.l.b16 %v728
        %v797 = vunpack.c.l.b16 %v729
        %v798 = vunpack.c.l.b16 %v730
        %v799 = vunpack.c.l.b16 %v731
        %v800 = vunpack.c.l.b16 %v732
        %v801 = vunpack.c.l.b16 %v733
        %v802 = vunpack.c.l.b16 %v734
        %v803 = vunpack.c.l.b16 %v735
        %v804 = vunpack.c.l.b16 %v736
        %v805 = vunpack.c.l.b16 %v737
        %v806 = vunpack.c.l.b16 %v738
        %v807 = vunpack.c.l.b16 %v739
        %v808 = vunpack.c.l.b16 %v740
        %v809 = vunpack.c.l.b16 %v741
        %v810 = vunpack.c.l.b16 %v742
        %v811 = vunpack.c.l.b16 %v743
        %v812 = vunpack.c.l.b16 %v744
        %v813 = vunpack.c.l.b16 %v745
        %v814 = vunpack.c.l.b16 %v746
        %v815 = vunpack.c.l.b16 %v747
        %v816 = vunpack.c.l.b16 %v748
        %v817 = vunpack.c.l.b16 %v749
        %v818 = vunpack.c.l.b16 %v750
        %v819 = vpack.c.b16 %v788, %v787
        %v820 = vpack.c.b16 %v790, %v789
        %v821 = vpack.c.b16 %v792, %v791
        %v822 = vpack.c.b16 %v794, %v793
        %v823 = vpack.c.b16 %v796, %v795
        %v824 = vpack.c.b16 %v798, %v797
        %v825 = vpack.c.b16 %v800, %v799
        %v826 = vpack.c.b16 %v802, %v801
        %v827 = vpack.c.b16 %v804, %v803
        %v828 = vpack.c.b16 %v806, %v805
        %v829 = vpack.c.b16 %v808, %v807
        %v830 = vpack.c.b16 %v810, %v809
        %v831 = vpack.c.b16 %v812, %v811
        %v832 = vpack.c.b16 %v814, %v813
        %v833 = vpack.c.b16 %v816, %v815
        %v834 = vpack.c.b16 %v818, %v817
        %851 = vmatpush.bf16.msra.mxu0 %v826
        %852 = vmatpush.bf16.msra.mxu0 %v825
        %853 = vmatpush.bf16.msra.mxu0 %v824
        %854 = vmatpush.bf16.msra.mxu0 %v823
        %855 = vmatpush.bf16.msra.mxu0 %v822
        %856 = vmatpush.bf16.msra.mxu0 %v821
        %857 = vmatpush.bf16.msra.mxu0 %v820
        %858 = vmatpush.bf16.msra.mxu0 %v819
        %859 = vmatmul.bf16.gmra.mxu0 %v717
        %v860 = vpop.f32.mrf.mxu0
        %v861 = vadd.f32 %v753, %v860
        %v862 = vpop.f32.mrf.mxu0
        %v863 = vadd.f32 %v753, %v862
        %864 = vdwg.mxu0
        %865 = vmatpush.bf16.msra.mxu0 %v834
        %866 = vmatpush.bf16.msra.mxu0 %v833
        %867 = vmatpush.bf16.msra.mxu0 %v832
        %868 = vmatpush.bf16.msra.mxu0 %v831
        %869 = vmatpush.bf16.msra.mxu0 %v830
        %870 = vmatpush.bf16.msra.mxu0 %v829
        %871 = vmatpush.bf16.msra.mxu0 %v828
        %872 = vmatpush.bf16.msra.mxu0 %v827
        %873 = vmatmul.bf16.gmra.mxu0 %v718
        %v874 = vpop.f32.mrf.mxu0
        %v875 = vadd.f32 %v861, %v874
        %v876 = vpop.f32.mrf.mxu0
        %v877 = vadd.f32 %v863, %v876
        %878 = vdwg.mxu0
        %v879 = vadd.f32 %v875, %v349
        %v880 = vadd.f32 %v877, %v350
        %881 = vst [vmem:[%s346] sm:$0xff] %v879
        %882 = vst [vmem:[%s346 + $0x8] sm:$0xff] %v880
        %s883 = sand.u32 %s186, 1
        %s884 = scalar_lea.sflag [#allocation4], %s883
        %s885 = sand.u32 %s186, 1
        %s886 = smul.addr %s885, 16
        %s887 = scalar_lea.vmem [#allocation10], %s886
        // Predicated region
        $region65: #{tpu_custom_call.1} parent=47 // pred_check
          %p888 = pneg %p196
        $region66: #{tpu_custom_call.1} parent=47 // pred_check_branch
          %890 = sbr.rel (%p888) target = $region68
        $region67: #{tpu_custom_call.1} parent=47 // pred_region
          %s891 = smul.u32 2, %s26
          %893 = vsyncadd %s884, 0
          %s894 = smul.addr %s891, 8
          %s895 = scalar_lea.hbm %s7, %s894
          %s896 = sshll.u32 %s887, 4
          %s897 = int_to_ptr.vmem [resolvable:$true] %s896
          %s898 = sshll.u32 %s895, 4
          %s899 = int_to_ptr.hbm [resolvable:$true] %s898
          %904 = dma.vmem_to_hbm [thread:$0]  %s897, 256, %s899, %s884, 128, 128, 8
        $region68: #{tpu_custom_call.1} parent=47 // pred_fallthru
          _
      $region48: #{tpu_custom_call.1} parent=5 // pred_fallthru
        _
      %p905 = scmp.le.s32.totalorder 2, %s21
      // Predicated region
      $region69: #{tpu_custom_call.1} parent=5 // pred_check
        %p906 = pneg %p905
      $region70: #{tpu_custom_call.1} parent=5 // pred_check_branch
        %908 = sbr.rel (%p906) target = $region72
      $region71: #{tpu_custom_call.1} parent=5 // pred_region
        %s909 = ssub.s32 %s21, 2
        // Predicated region
        $region73: #{tpu_custom_call.1} parent=71 // pred_check
          %p910 = pneg %p202
        $region74: #{tpu_custom_call.1} parent=71 // pred_check_branch
          %912 = sbr.rel (%p910) target = $region76
        $region75: #{tpu_custom_call.1} parent=71 // pred_region
          %s913 = sand.u32 %s187, 1
          %s914 = scalar_lea.sflag [#allocation4], %s913
          %s915 = sand.u32 %s187, 1
          %s916 = smul.addr %s915, 16
          %s917 = scalar_lea.vmem [#allocation10], %s916
          %919 = dma.done %s914, 256
        $region76: #{tpu_custom_call.1} parent=71 // pred_fallthru
          _
      $region72: #{tpu_custom_call.1} parent=5 // pred_fallthru
        _
    $region6: #{tpu_custom_call.1} parent=1 // loop_footer
      %s25 = sadd.s32 1, %s21
    $region7: #{tpu_custom_call.1} parent=1 // loop_footer_branch
      %20 = sbr.rel target = $region3
    $region8: #{tpu_custom_call.1} parent=1 // loop_exit
      _
    %920 = vsyncpa [#allocation3], 1
    %s921 = scalar_lea.sflag [#allocation3], 1
    %922 = vsyncpa %s921, 1
    %923 = vsyncpa [#allocation6], 1
    %924 = vsyncpa [#allocation9], 1
    %925 = vsyncpa [#allocation4], 1
    %s926 = scalar_lea.sflag [#allocation4], 1
    %927 = vsyncpa %s926, 1

</llo_original>
